<compile_context>
chip_gen: v5e
topology: v5e:2x2
jax: 0.10.0
libtpu: 0.0.40
codegen_flags: <defaults>
</compile_context>

<pallas_src>
import jax
import jax.numpy as jnp
from jax.experimental import pallas as pl
from jax.experimental.pallas import tpu as pltpu


def _make_mlp_kernel(n_feature, n_hidden, n_output):
    """Build a fully-unrolled VPU MLP kernel for static (F, H, O)."""
    F, H, O = n_feature, n_hidden, n_output
    # Flat SMEM parameter layout (all f32):
    #   [0, F*H)              w1, row-major: w1[f*H + h] = W1[f, h]
    #   [F*H, F*H+H)          b1
    #   [F*H+H, F*H+H+H*O)    w2, row-major: w2[h*O + o] = W2[h, o]
    #   [..., ...+O)          b2
    W1_OFF = 0
    B1_OFF = W1_OFF + F * H
    W2_OFF = B1_OFF + H
    B2_OFF = W2_OFF + H * O

    def kernel(p_ref, xt_ref, ot_ref):
        # p_ref : (F*H + H + H*O + O,) f32 in SMEM (scalar reads -> sregs)
        # xt_ref: (F, N) f32 in VMEM  (batch N on the lane axis, lane-dense)
        # ot_ref: (O, N) f32 in VMEM
        x_rows = [xt_ref[f:f + 1, :] for f in range(F)]        # each (1, N)

        # --- Layer 1: h[h, :] = relu(sum_f W1[f, h] * x[f, :] + b1[h])
        # Scalar-broadcast FMAs on the VPU; F and H are tiny so fully unrolled.
        h_rows = []
        for h in range(H):
            acc = p_ref[W1_OFF + 0 * H + h] * x_rows[0]
            for f in range(1, F):
                acc = acc + p_ref[W1_OFF + f * H + h] * x_rows[f]
            acc = acc + p_ref[B1_OFF + h]
            h_rows.append(jnp.maximum(acc, 0.0))                # ReLU, f32 VPU

        # --- Layer 2: y[o, :] = sum_h W2[h, o] * h[h, :] + b2[o]
        # Kept off the MXU: ten VPU FMAs per output row beat a <0.1%-utilized
        # matmul push/pop at this size.  Stores are lane-dense (N on lanes).
        for o in range(O):
            acc = p_ref[W2_OFF + 0 * O + o] * h_rows[0]
            for h in range(1, H):
                acc = acc + p_ref[W2_OFF + h * O + o] * h_rows[h]
            acc = acc + p_ref[B2_OFF + o]
            ot_ref[o:o + 1, :] = acc.astype(ot_ref.dtype)

    return kernel


@jax.jit
def net_forward(x, w1, b1, w2, b2):
    """relu(x @ w1 + b1) @ w2 + b2 as a single grid-less Pallas kernel.

    x : (N, F) f32;  w1: (F, H), b1: (H,);  w2: (H, O), b2: (O,)
    Returns (N, O) f32.

    NOTE: for a scaled-up model this should grow a grid axis over N
    (x^T / y^T tiled along the lane axis, dimension_semantics=("parallel",),
    params resident), with the N tile sized ~half as large on v7x (64 MiB
    VMEM) as on v5e/v6e (128 MiB); and on v6e/v7x a large layer-2 matmul
    would go back on the MXU with bf16 operands + f32 accumulation.  At
    200x2x10x2 the kernel is launch/DMA-overhead-bound, so one invocation,
    two inputs, and pure-VPU math is the fastest option.
    """
    N, F = x.shape
    H = w1.shape[1]
    O = w2.shape[1]

    # Pack all parameters into a single flat f32 operand that lives in SMEM.
    params = jnp.concatenate(
        [w1.reshape(-1), b1.reshape(-1), w2.reshape(-1), b2.reshape(-1)]
    ).astype(jnp.float32)
    x_t = x.T.astype(jnp.float32)                               # (F, N)

    kernel = _make_mlp_kernel(F, H, O)

    cost = pl.CostEstimate(
        flops=2 * (N * F * H + N * H * O),
        transcendentals=0,
        bytes_accessed=4 * (N * F + F * H + H + H * O + O + N * O),
    )

    y_t = pl.pallas_call(
        kernel,
        out_shape=jax.ShapeDtypeStruct((O, N), jnp.float32),
        in_specs=[
            pl.BlockSpec(memory_space=pltpu.MemorySpace.SMEM),  # packed params
            pl.BlockSpec(memory_space=pltpu.MemorySpace.VMEM),  # x^T
        ],
        out_specs=pl.BlockSpec(memory_space=pltpu.MemorySpace.VMEM),
        cost_estimate=cost,
    )(params, x_t)
    return y_t.T                                                # (N, O)


def init_params(key, n_feature, n_hidden, n_output):
    """PyTorch-style init: U(-1/sqrt(fan_in), 1/sqrt(fan_in))."""
    k1, k2, k3, k4 = jax.random.split(key, 4)
    bound1 = 1.0 / jnp.sqrt(jnp.float32(n_feature))
    bound2 = 1.0 / jnp.sqrt(jnp.float32(n_hidden))
    w1 = jax.random.uniform(k1, (n_feature, n_hidden), jnp.float32, -bound1, bound1)
    b1 = jax.random.uniform(k2, (n_hidden,), jnp.float32, -bound1, bound1)
    w2 = jax.random.uniform(k3, (n_hidden, n_output), jnp.float32, -bound2, bound2)
    b2 = jax.random.uniform(k4, (n_output,), jnp.float32, -bound2, bound2)
    return w1, b1, w2, b2


if __name__ == "__main__":
    # Shapes implied by the classification script: n_feature=2, n_hidden=10,
    # n_output=2, batch of 200 points (two Gaussian clusters of 100).
    n_feature, n_hidden, n_output = 2, 10, 2
    key = jax.random.PRNGKey(0)
    kx, kp = jax.random.split(key)

    # Synthetic data mirroring torch.normal(+/-2, 1) around (100, 2) ones.
    n_data = jnp.ones((100, 2), jnp.float32)
    kx0, kx1 = jax.random.split(kx)
    x0 = 2.0 * n_data + jax.random.normal(kx0, (100, 2), jnp.float32)
    x1 = -2.0 * n_data + jax.random.normal(kx1, (100, 2), jnp.float32)
    x = jnp.concatenate([x0, x1], axis=0).astype(jnp.float32)  # (200, 2)

    w1, b1, w2, b2 = init_params(kp, n_feature, n_hidden, n_output)

    out = jax.block_until_ready(net_forward(x, w1, b1, w2, b2))

    # Pure-JAX reference check of the forward pass.
    ref = jnp.maximum(x @ w1 + b1, 0.0) @ w2 + b2
    assert out.shape == (200, n_output)
    assert jnp.allclose(out, ref, atol=1e-5, rtol=1e-5), float(
        jnp.max(jnp.abs(out - ref))
    )

    print("KERNEL_OK")
</pallas_src>

<mosaic_0001>
module attributes {stable_mosaic.version = 11 : i64} {
  func.func @kernel(%arg0: memref<52xf32, #tpu.memory_space<smem>>, %arg1: memref<2x200xf32, #tpu.memory_space<vmem>>, %arg2: memref<2x200xf32, #tpu.memory_space<vmem>>) attributes {dimension_semantics = [], scalar_prefetch = 0 : i64, scratch_operands = 0 : i64, tpu.core_type = #tpu.core_type<tc>} {
    %c0 = arith.constant 0 : index
    %c0_0 = arith.constant 0 : index
    %0 = vector.load %arg1[%c0, %c0_0] : memref<2x200xf32, #tpu.memory_space<vmem>>, vector<1x200xf32>
    %c1 = arith.constant 1 : index
    %c0_1 = arith.constant 0 : index
    %1 = vector.load %arg1[%c1, %c0_1] : memref<2x200xf32, #tpu.memory_space<vmem>>, vector<1x200xf32>
    %c0_2 = arith.constant 0 : index
    %2 = memref.load %arg0[%c0_2] : memref<52xf32, #tpu.memory_space<smem>>
    %3 = vector.broadcast %2 : f32 to vector<1x200xf32>
    %4 = arith.mulf %3, %0 : vector<1x200xf32>
    %c10 = arith.constant 10 : index
    %5 = memref.load %arg0[%c10] : memref<52xf32, #tpu.memory_space<smem>>
    %6 = vector.broadcast %5 : f32 to vector<1x200xf32>
    %7 = arith.mulf %6, %1 : vector<1x200xf32>
    %8 = arith.addf %4, %7 : vector<1x200xf32>
    %c20 = arith.constant 20 : index
    %9 = memref.load %arg0[%c20] : memref<52xf32, #tpu.memory_space<smem>>
    %10 = vector.broadcast %9 : f32 to vector<1x200xf32>
    %11 = arith.addf %8, %10 : vector<1x200xf32>
    %cst = arith.constant 0.000000e+00 : f32
    %12 = vector.broadcast %cst : f32 to vector<1x200xf32>
    %13 = arith.maximumf %11, %12 : vector<1x200xf32>
    %c1_3 = arith.constant 1 : index
    %14 = memref.load %arg0[%c1_3] : memref<52xf32, #tpu.memory_space<smem>>
    %15 = vector.broadcast %14 : f32 to vector<1x200xf32>
    %16 = arith.mulf %15, %0 : vector<1x200xf32>
    %c11 = arith.constant 11 : index
    %17 = memref.load %arg0[%c11] : memref<52xf32, #tpu.memory_space<smem>>
    %18 = vector.broadcast %17 : f32 to vector<1x200xf32>
    %19 = arith.mulf %18, %1 : vector<1x200xf32>
    %20 = arith.addf %16, %19 : vector<1x200xf32>
    %c21 = arith.constant 21 : index
    %21 = memref.load %arg0[%c21] : memref<52xf32, #tpu.memory_space<smem>>
    %22 = vector.broadcast %21 : f32 to vector<1x200xf32>
    %23 = arith.addf %20, %22 : vector<1x200xf32>
    %cst_4 = arith.constant 0.000000e+00 : f32
    %24 = vector.broadcast %cst_4 : f32 to vector<1x200xf32>
    %25 = arith.maximumf %23, %24 : vector<1x200xf32>
    %c2 = arith.constant 2 : index
    %26 = memref.load %arg0[%c2] : memref<52xf32, #tpu.memory_space<smem>>
    %27 = vector.broadcast %26 : f32 to vector<1x200xf32>
    %28 = arith.mulf %27, %0 : vector<1x200xf32>
    %c12 = arith.constant 12 : index
    %29 = memref.load %arg0[%c12] : memref<52xf32, #tpu.memory_space<smem>>
    %30 = vector.broadcast %29 : f32 to vector<1x200xf32>
    %31 = arith.mulf %30, %1 : vector<1x200xf32>
    %32 = arith.addf %28, %31 : vector<1x200xf32>
    %c22 = arith.constant 22 : index
    %33 = memref.load %arg0[%c22] : memref<52xf32, #tpu.memory_space<smem>>
    %34 = vector.broadcast %33 : f32 to vector<1x200xf32>
    %35 = arith.addf %32, %34 : vector<1x200xf32>
    %cst_5 = arith.constant 0.000000e+00 : f32
    %36 = vector.broadcast %cst_5 : f32 to vector<1x200xf32>
    %37 = arith.maximumf %35, %36 : vector<1x200xf32>
    %c3 = arith.constant 3 : index
    %38 = memref.load %arg0[%c3] : memref<52xf32, #tpu.memory_space<smem>>
    %39 = vector.broadcast %38 : f32 to vector<1x200xf32>
    %40 = arith.mulf %39, %0 : vector<1x200xf32>
    %c13 = arith.constant 13 : index
    %41 = memref.load %arg0[%c13] : memref<52xf32, #tpu.memory_space<smem>>
    %42 = vector.broadcast %41 : f32 to vector<1x200xf32>
    %43 = arith.mulf %42, %1 : vector<1x200xf32>
    %44 = arith.addf %40, %43 : vector<1x200xf32>
    %c23 = arith.constant 23 : index
    %45 = memref.load %arg0[%c23] : memref<52xf32, #tpu.memory_space<smem>>
    %46 = vector.broadcast %45 : f32 to vector<1x200xf32>
    %47 = arith.addf %44, %46 : vector<1x200xf32>
    %cst_6 = arith.constant 0.000000e+00 : f32
    %48 = vector.broadcast %cst_6 : f32 to vector<1x200xf32>
    %49 = arith.maximumf %47, %48 : vector<1x200xf32>
    %c4 = arith.constant 4 : index
    %50 = memref.load %arg0[%c4] : memref<52xf32, #tpu.memory_space<smem>>
    %51 = vector.broadcast %50 : f32 to vector<1x200xf32>
    %52 = arith.mulf %51, %0 : vector<1x200xf32>
    %c14 = arith.constant 14 : index
    %53 = memref.load %arg0[%c14] : memref<52xf32, #tpu.memory_space<smem>>
    %54 = vector.broadcast %53 : f32 to vector<1x200xf32>
    %55 = arith.mulf %54, %1 : vector<1x200xf32>
    %56 = arith.addf %52, %55 : vector<1x200xf32>
    %c24 = arith.constant 24 : index
    %57 = memref.load %arg0[%c24] : memref<52xf32, #tpu.memory_space<smem>>
    %58 = vector.broadcast %57 : f32 to vector<1x200xf32>
    %59 = arith.addf %56, %58 : vector<1x200xf32>
    %cst_7 = arith.constant 0.000000e+00 : f32
    %60 = vector.broadcast %cst_7 : f32 to vector<1x200xf32>
    %61 = arith.maximumf %59, %60 : vector<1x200xf32>
    %c5 = arith.constant 5 : index
    %62 = memref.load %arg0[%c5] : memref<52xf32, #tpu.memory_space<smem>>
    %63 = vector.broadcast %62 : f32 to vector<1x200xf32>
    %64 = arith.mulf %63, %0 : vector<1x200xf32>
    %c15 = arith.constant 15 : index
    %65 = memref.load %arg0[%c15] : memref<52xf32, #tpu.memory_space<smem>>
    %66 = vector.broadcast %65 : f32 to vector<1x200xf32>
    %67 = arith.mulf %66, %1 : vector<1x200xf32>
    %68 = arith.addf %64, %67 : vector<1x200xf32>
    %c25 = arith.constant 25 : index
    %69 = memref.load %arg0[%c25] : memref<52xf32, #tpu.memory_space<smem>>
    %70 = vector.broadcast %69 : f32 to vector<1x200xf32>
    %71 = arith.addf %68, %70 : vector<1x200xf32>
    %cst_8 = arith.constant 0.000000e+00 : f32
    %72 = vector.broadcast %cst_8 : f32 to vector<1x200xf32>
    %73 = arith.maximumf %71, %72 : vector<1x200xf32>
    %c6 = arith.constant 6 : index
    %74 = memref.load %arg0[%c6] : memref<52xf32, #tpu.memory_space<smem>>
    %75 = vector.broadcast %74 : f32 to vector<1x200xf32>
    %76 = arith.mulf %75, %0 : vector<1x200xf32>
    %c16 = arith.constant 16 : index
    %77 = memref.load %arg0[%c16] : memref<52xf32, #tpu.memory_space<smem>>
    %78 = vector.broadcast %77 : f32 to vector<1x200xf32>
    %79 = arith.mulf %78, %1 : vector<1x200xf32>
    %80 = arith.addf %76, %79 : vector<1x200xf32>
    %c26 = arith.constant 26 : index
    %81 = memref.load %arg0[%c26] : memref<52xf32, #tpu.memory_space<smem>>
    %82 = vector.broadcast %81 : f32 to vector<1x200xf32>
    %83 = arith.addf %80, %82 : vector<1x200xf32>
    %cst_9 = arith.constant 0.000000e+00 : f32
    %84 = vector.broadcast %cst_9 : f32 to vector<1x200xf32>
    %85 = arith.maximumf %83, %84 : vector<1x200xf32>
    %c7 = arith.constant 7 : index
    %86 = memref.load %arg0[%c7] : memref<52xf32, #tpu.memory_space<smem>>
    %87 = vector.broadcast %86 : f32 to vector<1x200xf32>
    %88 = arith.mulf %87, %0 : vector<1x200xf32>
    %c17 = arith.constant 17 : index
    %89 = memref.load %arg0[%c17] : memref<52xf32, #tpu.memory_space<smem>>
    %90 = vector.broadcast %89 : f32 to vector<1x200xf32>
    %91 = arith.mulf %90, %1 : vector<1x200xf32>
    %92 = arith.addf %88, %91 : vector<1x200xf32>
    %c27 = arith.constant 27 : index
    %93 = memref.load %arg0[%c27] : memref<52xf32, #tpu.memory_space<smem>>
    %94 = vector.broadcast %93 : f32 to vector<1x200xf32>
    %95 = arith.addf %92, %94 : vector<1x200xf32>
    %cst_10 = arith.constant 0.000000e+00 : f32
    %96 = vector.broadcast %cst_10 : f32 to vector<1x200xf32>
    %97 = arith.maximumf %95, %96 : vector<1x200xf32>
    %c8 = arith.constant 8 : index
    %98 = memref.load %arg0[%c8] : memref<52xf32, #tpu.memory_space<smem>>
    %99 = vector.broadcast %98 : f32 to vector<1x200xf32>
    %100 = arith.mulf %99, %0 : vector<1x200xf32>
    %c18 = arith.constant 18 : index
    %101 = memref.load %arg0[%c18] : memref<52xf32, #tpu.memory_space<smem>>
    %102 = vector.broadcast %101 : f32 to vector<1x200xf32>
    %103 = arith.mulf %102, %1 : vector<1x200xf32>
    %104 = arith.addf %100, %103 : vector<1x200xf32>
    %c28 = arith.constant 28 : index
    %105 = memref.load %arg0[%c28] : memref<52xf32, #tpu.memory_space<smem>>
    %106 = vector.broadcast %105 : f32 to vector<1x200xf32>
    %107 = arith.addf %104, %106 : vector<1x200xf32>
    %cst_11 = arith.constant 0.000000e+00 : f32
    %108 = vector.broadcast %cst_11 : f32 to vector<1x200xf32>
    %109 = arith.maximumf %107, %108 : vector<1x200xf32>
    %c9 = arith.constant 9 : index
    %110 = memref.load %arg0[%c9] : memref<52xf32, #tpu.memory_space<smem>>
    %111 = vector.broadcast %110 : f32 to vector<1x200xf32>
    %112 = arith.mulf %111, %0 : vector<1x200xf32>
    %c19 = arith.constant 19 : index
    %113 = memref.load %arg0[%c19] : memref<52xf32, #tpu.memory_space<smem>>
    %114 = vector.broadcast %113 : f32 to vector<1x200xf32>
    %115 = arith.mulf %114, %1 : vector<1x200xf32>
    %116 = arith.addf %112, %115 : vector<1x200xf32>
    %c29 = arith.constant 29 : index
    %117 = memref.load %arg0[%c29] : memref<52xf32, #tpu.memory_space<smem>>
    %118 = vector.broadcast %117 : f32 to vector<1x200xf32>
    %119 = arith.addf %116, %118 : vector<1x200xf32>
    %cst_12 = arith.constant 0.000000e+00 : f32
    %120 = vector.broadcast %cst_12 : f32 to vector<1x200xf32>
    %121 = arith.maximumf %119, %120 : vector<1x200xf32>
    %c30 = arith.constant 30 : index
    %122 = memref.load %arg0[%c30] : memref<52xf32, #tpu.memory_space<smem>>
    %123 = vector.broadcast %122 : f32 to vector<1x200xf32>
    %124 = arith.mulf %123, %13 : vector<1x200xf32>
    %c32 = arith.constant 32 : index
    %125 = memref.load %arg0[%c32] : memref<52xf32, #tpu.memory_space<smem>>
    %126 = vector.broadcast %125 : f32 to vector<1x200xf32>
    %127 = arith.mulf %126, %25 : vector<1x200xf32>
    %128 = arith.addf %124, %127 : vector<1x200xf32>
    %c34 = arith.constant 34 : index
    %129 = memref.load %arg0[%c34] : memref<52xf32, #tpu.memory_space<smem>>
    %130 = vector.broadcast %129 : f32 to vector<1x200xf32>
    %131 = arith.mulf %130, %37 : vector<1x200xf32>
    %132 = arith.addf %128, %131 : vector<1x200xf32>
    %c36 = arith.constant 36 : index
    %133 = memref.load %arg0[%c36] : memref<52xf32, #tpu.memory_space<smem>>
    %134 = vector.broadcast %133 : f32 to vector<1x200xf32>
    %135 = arith.mulf %134, %49 : vector<1x200xf32>
    %136 = arith.addf %132, %135 : vector<1x200xf32>
    %c38 = arith.constant 38 : index
    %137 = memref.load %arg0[%c38] : memref<52xf32, #tpu.memory_space<smem>>
    %138 = vector.broadcast %137 : f32 to vector<1x200xf32>
    %139 = arith.mulf %138, %61 : vector<1x200xf32>
    %140 = arith.addf %136, %139 : vector<1x200xf32>
    %c40 = arith.constant 40 : index
    %141 = memref.load %arg0[%c40] : memref<52xf32, #tpu.memory_space<smem>>
    %142 = vector.broadcast %141 : f32 to vector<1x200xf32>
    %143 = arith.mulf %142, %73 : vector<1x200xf32>
    %144 = arith.addf %140, %143 : vector<1x200xf32>
    %c42 = arith.constant 42 : index
    %145 = memref.load %arg0[%c42] : memref<52xf32, #tpu.memory_space<smem>>
    %146 = vector.broadcast %145 : f32 to vector<1x200xf32>
    %147 = arith.mulf %146, %85 : vector<1x200xf32>
    %148 = arith.addf %144, %147 : vector<1x200xf32>
    %c44 = arith.constant 44 : index
    %149 = memref.load %arg0[%c44] : memref<52xf32, #tpu.memory_space<smem>>
    %150 = vector.broadcast %149 : f32 to vector<1x200xf32>
    %151 = arith.mulf %150, %97 : vector<1x200xf32>
    %152 = arith.addf %148, %151 : vector<1x200xf32>
    %c46 = arith.constant 46 : index
    %153 = memref.load %arg0[%c46] : memref<52xf32, #tpu.memory_space<smem>>
    %154 = vector.broadcast %153 : f32 to vector<1x200xf32>
    %155 = arith.mulf %154, %109 : vector<1x200xf32>
    %156 = arith.addf %152, %155 : vector<1x200xf32>
    %c48 = arith.constant 48 : index
    %157 = memref.load %arg0[%c48] : memref<52xf32, #tpu.memory_space<smem>>
    %158 = vector.broadcast %157 : f32 to vector<1x200xf32>
    %159 = arith.mulf %158, %121 : vector<1x200xf32>
    %160 = arith.addf %156, %159 : vector<1x200xf32>
    %c50 = arith.constant 50 : index
    %161 = memref.load %arg0[%c50] : memref<52xf32, #tpu.memory_space<smem>>
    %162 = vector.broadcast %161 : f32 to vector<1x200xf32>
    %163 = arith.addf %160, %162 : vector<1x200xf32>
    %c0_13 = arith.constant 0 : index
    %c0_14 = arith.constant 0 : index
    %164 = vector.load %arg2[%c0_13, %c0_14] : memref<2x200xf32, #tpu.memory_space<vmem>>, vector<1x200xf32>
    tpu.vector_store %arg2[%c0_13, %c0_14], %163 {strides = array<i32>} : memref<2x200xf32, #tpu.memory_space<vmem>>, vector<1x200xf32>,
    %c31 = arith.constant 31 : index
    %165 = memref.load %arg0[%c31] : memref<52xf32, #tpu.memory_space<smem>>
    %166 = vector.broadcast %165 : f32 to vector<1x200xf32>
    %167 = arith.mulf %166, %13 : vector<1x200xf32>
    %c33 = arith.constant 33 : index
    %168 = memref.load %arg0[%c33] : memref<52xf32, #tpu.memory_space<smem>>
    %169 = vector.broadcast %168 : f32 to vector<1x200xf32>
    %170 = arith.mulf %169, %25 : vector<1x200xf32>
    %171 = arith.addf %167, %170 : vector<1x200xf32>
    %c35 = arith.constant 35 : index
    %172 = memref.load %arg0[%c35] : memref<52xf32, #tpu.memory_space<smem>>
    %173 = vector.broadcast %172 : f32 to vector<1x200xf32>
    %174 = arith.mulf %173, %37 : vector<1x200xf32>
    %175 = arith.addf %171, %174 : vector<1x200xf32>
    %c37 = arith.constant 37 : index
    %176 = memref.load %arg0[%c37] : memref<52xf32, #tpu.memory_space<smem>>
    %177 = vector.broadcast %176 : f32 to vector<1x200xf32>
    %178 = arith.mulf %177, %49 : vector<1x200xf32>
    %179 = arith.addf %175, %178 : vector<1x200xf32>
    %c39 = arith.constant 39 : index
    %180 = memref.load %arg0[%c39] : memref<52xf32, #tpu.memory_space<smem>>
    %181 = vector.broadcast %180 : f32 to vector<1x200xf32>
    %182 = arith.mulf %181, %61 : vector<1x200xf32>
    %183 = arith.addf %179, %182 : vector<1x200xf32>
    %c41 = arith.constant 41 : index
    %184 = memref.load %arg0[%c41] : memref<52xf32, #tpu.memory_space<smem>>
    %185 = vector.broadcast %184 : f32 to vector<1x200xf32>
    %186 = arith.mulf %185, %73 : vector<1x200xf32>
    %187 = arith.addf %183, %186 : vector<1x200xf32>
    %c43 = arith.constant 43 : index
    %188 = memref.load %arg0[%c43] : memref<52xf32, #tpu.memory_space<smem>>
    %189 = vector.broadcast %188 : f32 to vector<1x200xf32>
    %190 = arith.mulf %189, %85 : vector<1x200xf32>
    %191 = arith.addf %187, %190 : vector<1x200xf32>
    %c45 = arith.constant 45 : index
    %192 = memref.load %arg0[%c45] : memref<52xf32, #tpu.memory_space<smem>>
    %193 = vector.broadcast %192 : f32 to vector<1x200xf32>
    %194 = arith.mulf %193, %97 : vector<1x200xf32>
    %195 = arith.addf %191, %194 : vector<1x200xf32>
    %c47 = arith.constant 47 : index
    %196 = memref.load %arg0[%c47] : memref<52xf32, #tpu.memory_space<smem>>
    %197 = vector.broadcast %196 : f32 to vector<1x200xf32>
    %198 = arith.mulf %197, %109 : vector<1x200xf32>
    %199 = arith.addf %195, %198 : vector<1x200xf32>
    %c49 = arith.constant 49 : index
    %200 = memref.load %arg0[%c49] : memref<52xf32, #tpu.memory_space<smem>>
    %201 = vector.broadcast %200 : f32 to vector<1x200xf32>
    %202 = arith.mulf %201, %121 : vector<1x200xf32>
    %203 = arith.addf %199, %202 : vector<1x200xf32>
    %c51 = arith.constant 51 : index
    %204 = memref.load %arg0[%c51] : memref<52xf32, #tpu.memory_space<smem>>
    %205 = vector.broadcast %204 : f32 to vector<1x200xf32>
    %206 = arith.addf %203, %205 : vector<1x200xf32>
    %c1_15 = arith.constant 1 : index
    %c0_16 = arith.constant 0 : index
    %207 = vector.load %arg2[%c1_15, %c0_16] : memref<2x200xf32, #tpu.memory_space<vmem>>, vector<1x200xf32>
    tpu.vector_store %arg2[%c1_15, %c0_16], %206 {strides = array<i32>} : memref<2x200xf32, #tpu.memory_space<vmem>>, vector<1x200xf32>,
    return
  }
}

</mosaic_0001>

<llo_original>
// kernel: net_forward.1
$region0: #{net_forward.1}
  #allocation0 [shape = 'u32[]', space=smem, size = 0x4, offset = 0x4, fixed_abs, tag = 'smem constant byte address 0x4 - core index']
  #allocation1 [shape = 'u32[72,128]{1,0:T(1,128)}', space=vmem, size = 0x9000, scoped, tag = 'internal scratch']
  %s0 = inlined_call_operand.vmem [shape: f32[52], index: 0, kind: input, shape index: {}]
  %s1 = inlined_call_operand.vmem [shape: f32[2,200], index: 1, kind: input, shape index: {}]
  %s2 = inlined_call_operand.hbm [shape: f32[2,200], index: 2, kind: output, shape index: {}]
  %s3 = sld [smem:[#allocation0]]
  $region22: #{net_forward.1} parent=0
    _
  %s5 = ssub.s32 1, %s3
  %s6 = scalar_select 0, %s5, %s3
  $region1: #{net_forward.1} parent=0
    #allocation2 [shape = 'u8[512]{0}', space=smem, size = 0x200, scoped, tag = 'input window, operand 0, single buffered']
    #allocation3 [shape = 's32[1]{0}', space=sflag, size = 0x4, scoped, tag = 'scoped memory for net_forward.1']
    #allocation4 [shape = 's32[1]{0}', space=sflag, size = 0x4, scoped, tag = 'scoped memory for net_forward.1']
    #allocation5 [shape = 'u8[2048]{0}', space=vmem, size = 0x800, scoped, tag = 'output window, operand 0, single buffered']
    %7 = vsyncpa [#allocation4], 0
    %8 = vsyncpa [#allocation3], 0
    // Predicated region
    $region2: #{net_forward.1} parent=1 // pred_check
      _
    $region3: #{net_forward.1} parent=1 // pred_check_branch
      %10 = sbr.rel (0) target = $region5
    $region4: #{net_forward.1} parent=1 // pred_region
      %12 = vsyncadd [#allocation4], 0
      %s14 = sshll.u32 %s0, 4
      %s15 = int_to_ptr.vmem [resolvable:$true] %s14
      %17 = dma.vmem_to_smem %s15, 16, [#allocation2], [#allocation4]
    $region5: #{net_forward.1} parent=1 // pred_fallthru
      _
    // Predicated region
    $region6: #{net_forward.1} parent=1 // pred_check
      _
    $region7: #{net_forward.1} parent=1 // pred_check_branch
      %19 = sbr.rel (0) target = $region9
    $region8: #{net_forward.1} parent=1 // pred_region
      _
    $region9: #{net_forward.1} parent=1 // pred_fallthru
      _
    // Predicated region
    $region10: #{net_forward.1} parent=1 // pred_check
      _
    $region11: #{net_forward.1} parent=1 // pred_check_branch
      %21 = sbr.rel (0) target = $region13
    $region12: #{net_forward.1} parent=1 // pred_region
      %23 = dma.done [#allocation4], 16
    $region13: #{net_forward.1} parent=1 // pred_fallthru
      _
    %24 = sfence
    %v25 = vld [vmem:[%s1] ss:$2 sm:$0x3]
    %s26 = scalar_lea.vmem %s1, 1
    %v27 = vld [vmem:[%s26] ss:$2 sm:$0x3]
    %s28 = sld [smem:[#allocation2]]
    %v29 = vstv %s28
    %v30 = vmul.f32 %v29, %v25
    %s31 = sld [smem:[#allocation2 + $0xa]]
    %v32 = vstv %s31
    %v33 = vmul.f32 %v32, %v27
    %v34 = vadd.f32 %v30, %v33
    %s35 = sld [smem:[#allocation2 + $0x14]]
    %v36 = vstv %s35
    %v37 = vadd.f32 %v34, %v36
    %v38 = vmax.f32 %v37, 0.0
    %s39 = sld [smem:[#allocation2 + $0x1]]
    %v40 = vstv %s39
    %v41 = vmul.f32 %v40, %v25
    %s42 = sld [smem:[#allocation2 + $0xb]]
    %v43 = vstv %s42
    %v44 = vmul.f32 %v43, %v27
    %v45 = vadd.f32 %v41, %v44
    %s46 = sld [smem:[#allocation2 + $0x15]]
    %v47 = vstv %s46
    %v48 = vadd.f32 %v45, %v47
    %v49 = vmax.f32 %v48, 0.0
    %s50 = sld [smem:[#allocation2 + $0x2]]
    %v51 = vstv %s50
    %v52 = vmul.f32 %v51, %v25
    %s53 = sld [smem:[#allocation2 + $0xc]]
    %v54 = vstv %s53
    %v55 = vmul.f32 %v54, %v27
    %v56 = vadd.f32 %v52, %v55
    %s57 = sld [smem:[#allocation2 + $0x16]]
    %v58 = vstv %s57
    %v59 = vadd.f32 %v56, %v58
    %v60 = vmax.f32 %v59, 0.0
    %s61 = sld [smem:[#allocation2 + $0x3]]
    %v62 = vstv %s61
    %v63 = vmul.f32 %v62, %v25
    %s64 = sld [smem:[#allocation2 + $0xd]]
    %v65 = vstv %s64
    %v66 = vmul.f32 %v65, %v27
    %v67 = vadd.f32 %v63, %v66
    %s68 = sld [smem:[#allocation2 + $0x17]]
    %v69 = vstv %s68
    %v70 = vadd.f32 %v67, %v69
    %v71 = vmax.f32 %v70, 0.0
    %s72 = sld [smem:[#allocation2 + $0x4]]
    %v73 = vstv %s72
    %v74 = vmul.f32 %v73, %v25
    %s75 = sld [smem:[#allocation2 + $0xe]]
    %v76 = vstv %s75
    %v77 = vmul.f32 %v76, %v27
    %v78 = vadd.f32 %v74, %v77
    %s79 = sld [smem:[#allocation2 + $0x18]]
    %v80 = vstv %s79
    %v81 = vadd.f32 %v78, %v80
    %v82 = vmax.f32 %v81, 0.0
    %s83 = sld [smem:[#allocation2 + $0x5]]
    %v84 = vstv %s83
    %v85 = vmul.f32 %v84, %v25
    %s86 = sld [smem:[#allocation2 + $0xf]]
    %v87 = vstv %s86
    %v88 = vmul.f32 %v87, %v27
    %v89 = vadd.f32 %v85, %v88
    %s90 = sld [smem:[#allocation2 + $0x19]]
    %v91 = vstv %s90
    %v92 = vadd.f32 %v89, %v91
    %v93 = vmax.f32 %v92, 0.0
    %s94 = sld [smem:[#allocation2 + $0x6]]
    %v95 = vstv %s94
    %v96 = vmul.f32 %v95, %v25
    %s97 = sld [smem:[#allocation2 + $0x10]]
    %v98 = vstv %s97
    %v99 = vmul.f32 %v98, %v27
    %v100 = vadd.f32 %v96, %v99
    %s101 = sld [smem:[#allocation2 + $0x1a]]
    %v102 = vstv %s101
    %v103 = vadd.f32 %v100, %v102
    %v104 = vmax.f32 %v103, 0.0
    %s105 = sld [smem:[#allocation2 + $0x7]]
    %v106 = vstv %s105
    %v107 = vmul.f32 %v106, %v25
    %s108 = sld [smem:[#allocation2 + $0x11]]
    %v109 = vstv %s108
    %v110 = vmul.f32 %v109, %v27
    %v111 = vadd.f32 %v107, %v110
    %s112 = sld [smem:[#allocation2 + $0x1b]]
    %v113 = vstv %s112
    %v114 = vadd.f32 %v111, %v113
    %v115 = vmax.f32 %v114, 0.0
    %s116 = sld [smem:[#allocation2 + $0x8]]
    %v117 = vstv %s116
    %v118 = vmul.f32 %v117, %v25
    %s119 = sld [smem:[#allocation2 + $0x12]]
    %v120 = vstv %s119
    %v121 = vmul.f32 %v120, %v27
    %v122 = vadd.f32 %v118, %v121
    %s123 = sld [smem:[#allocation2 + $0x1c]]
    %v124 = vstv %s123
    %v125 = vadd.f32 %v122, %v124
    %v126 = vmax.f32 %v125, 0.0
    %s127 = sld [smem:[#allocation2 + $0x9]]
    %v128 = vstv %s127
    %v129 = vmul.f32 %v128, %v25
    %s130 = sld [smem:[#allocation2 + $0x13]]
    %v131 = vstv %s130
    %v132 = vmul.f32 %v131, %v27
    %v133 = vadd.f32 %v129, %v132
    %s134 = sld [smem:[#allocation2 + $0x1d]]
    %v135 = vstv %s134
    %v136 = vadd.f32 %v133, %v135
    %v137 = vmax.f32 %v136, 0.0
    %s138 = sld [smem:[#allocation2 + $0x1e]]
    %v139 = vstv %s138
    %v140 = vmul.f32 %v139, %v38
    %s141 = sld [smem:[#allocation2 + $0x20]]
    %v142 = vstv %s141
    %v143 = vmul.f32 %v142, %v49
    %v144 = vadd.f32 %v140, %v143
    %s145 = sld [smem:[#allocation2 + $0x22]]
    %v146 = vstv %s145
    %v147 = vmul.f32 %v146, %v60
    %v148 = vadd.f32 %v144, %v147
    %s149 = sld [smem:[#allocation2 + $0x24]]
    %v150 = vstv %s149
    %v151 = vmul.f32 %v150, %v71
    %v152 = vadd.f32 %v148, %v151
    %s153 = sld [smem:[#allocation2 + $0x26]]
    %v154 = vstv %s153
    %v155 = vmul.f32 %v154, %v82
    %v156 = vadd.f32 %v152, %v155
    %s157 = sld [smem:[#allocation2 + $0x28]]
    %v158 = vstv %s157
    %v159 = vmul.f32 %v158, %v93
    %v160 = vadd.f32 %v156, %v159
    %s161 = sld [smem:[#allocation2 + $0x2a]]
    %v162 = vstv %s161
    %v163 = vmul.f32 %v162, %v104
    %v164 = vadd.f32 %v160, %v163
    %s165 = sld [smem:[#allocation2 + $0x2c]]
    %v166 = vstv %s165
    %v167 = vmul.f32 %v166, %v115
    %v168 = vadd.f32 %v164, %v167
    %s169 = sld [smem:[#allocation2 + $0x2e]]
    %v170 = vstv %s169
    %v171 = vmul.f32 %v170, %v126
    %v172 = vadd.f32 %v168, %v171
    %s173 = sld [smem:[#allocation2 + $0x30]]
    %v174 = vstv %s173
    %v175 = vmul.f32 %v174, %v137
    %v176 = vadd.f32 %v172, %v175
    %s177 = sld [smem:[#allocation2 + $0x32]]
    %v178 = vstv %s177
    %v179 = vadd.f32 %v176, %v178
    %v180 = vlaneseq
    %vm181 = vcmp.ge.s32.totalorder %v180, 0
    %vm182 = vcmp.lt.s32.totalorder %v180, 200
    %vm183 = vmand %vm181, %vm182
    %184 = vst.msk [vmem:[#allocation5] ss:$2 sm:$0x3] %vm183, %v179
    %s185 = sld [smem:[#allocation2 + $0x1f]]
    %v186 = vstv %s185
    %v187 = vmul.f32 %v186, %v38
    %s188 = sld [smem:[#allocation2 + $0x21]]
    %v189 = vstv %s188
    %v190 = vmul.f32 %v189, %v49
    %v191 = vadd.f32 %v187, %v190
    %s192 = sld [smem:[#allocation2 + $0x23]]
    %v193 = vstv %s192
    %v194 = vmul.f32 %v193, %v60
    %v195 = vadd.f32 %v191, %v194
    %s196 = sld [smem:[#allocation2 + $0x25]]
    %v197 = vstv %s196
    %v198 = vmul.f32 %v197, %v71
    %v199 = vadd.f32 %v195, %v198
    %s200 = sld [smem:[#allocation2 + $0x27]]
    %v201 = vstv %s200
    %v202 = vmul.f32 %v201, %v82
    %v203 = vadd.f32 %v199, %v202
    %s204 = sld [smem:[#allocation2 + $0x29]]
    %v205 = vstv %s204
    %v206 = vmul.f32 %v205, %v93
    %v207 = vadd.f32 %v203, %v206
    %s208 = sld [smem:[#allocation2 + $0x2b]]
    %v209 = vstv %s208
    %v210 = vmul.f32 %v209, %v104
    %v211 = vadd.f32 %v207, %v210
    %s212 = sld [smem:[#allocation2 + $0x2d]]
    %v213 = vstv %s212
    %v214 = vmul.f32 %v213, %v115
    %v215 = vadd.f32 %v211, %v214
    %s216 = sld [smem:[#allocation2 + $0x2f]]
    %v217 = vstv %s216
    %v218 = vmul.f32 %v217, %v126
    %v219 = vadd.f32 %v215, %v218
    %s220 = sld [smem:[#allocation2 + $0x31]]
    %v221 = vstv %s220
    %v222 = vmul.f32 %v221, %v137
    %v223 = vadd.f32 %v219, %v222
    %s224 = sld [smem:[#allocation2 + $0x33]]
    %v225 = vstv %s224
    %v226 = vadd.f32 %v223, %v225
    %s227 = scalar_lea.vmem [#allocation5], 1
    %228 = vst.msk [vmem:[%s227] ss:$2 sm:$0x3] %vm183, %v226
    // Predicated region
    $region14: #{net_forward.1} parent=1 // pred_check
      _
    $region15: #{net_forward.1} parent=1 // pred_check_branch
      %230 = sbr.rel (0) target = $region17
    $region16: #{net_forward.1} parent=1 // pred_region
      %232 = vsyncadd [#allocation3], 0
      %s234 = sshll.u32 [#allocation5], 4
      %s235 = int_to_ptr.vmem [resolvable:$true] %s234
      %s236 = sshll.u32 %s2, 4
      %s237 = int_to_ptr.hbm [resolvable:$true] %s236
      %239 = dma.vmem_to_hbm [thread:$0]  %s235, 64, %s237, [#allocation3]
    $region17: #{net_forward.1} parent=1 // pred_fallthru
      _
    // Predicated region
    $region18: #{net_forward.1} parent=1 // pred_check
      _
    $region19: #{net_forward.1} parent=1 // pred_check_branch
      %241 = sbr.rel (0) target = $region21
    $region20: #{net_forward.1} parent=1 // pred_region
      %243 = dma.done [#allocation3], 64
    $region21: #{net_forward.1} parent=1 // pred_fallthru
      _
    %244 = vsyncpa [#allocation3], 1
    %245 = vsyncpa [#allocation4], 1

</llo_original>
